<compile_context>
chip_gen: v7x
topology: tpu7x:2x2x1
jax: 0.10.0
libtpu: 0.0.40
codegen_flags: <defaults>
</compile_context>

<pallas_src>
import functools

import jax
import jax.numpy as jnp
from jax import lax
from jax.experimental import pallas as pl
from jax.experimental.pallas import tpu as pltpu

IN, OUT = 64, 32


def linear_tanh_kernel(x_ref, w_ref, o_ref):
    # One MXU matmul (bias already folded into w as an extra row matched by a
    # ones column in x), f32 accumulation, tanh on the EUP.
    y = jnp.dot(
        x_ref[...],
        w_ref[...],
        preferred_element_type=jnp.float32,
        precision=lax.Precision.HIGHEST,
    )
    o_ref[...] = jnp.tanh(y).astype(o_ref.dtype)


def prepare_params(w, b):
    """One-time parameter prep (hoisted off the per-call hot path).

    w: (IN, OUT) f32, b: (OUT,) f32.
    Returns:
      w_folded: (K_p, OUT) -- rows [0, IN) are w, row IN is b, remaining rows
                (sublane padding up to a multiple of 8) are zeros.
      x_tail:   (1, K_p - IN) -- [1, 0, ..., 0]; concatenated to x per call so
                the ones column multiplies the bias row.
    """
    in_dim, out_dim = w.shape
    k_p = ((in_dim + 1 + 7) // 8) * 8  # fold bias row, round K to 8 sublanes
    w_folded = jnp.zeros((k_p, out_dim), dtype=w.dtype)
    w_folded = w_folded.at[:in_dim, :].set(w)
    w_folded = w_folded.at[in_dim, :].set(b)
    x_tail = jnp.zeros((1, k_p - in_dim), dtype=w.dtype).at[0, 0].set(1.0)
    return w_folded, x_tail


@jax.jit
def linear_tanh(x, w_folded, x_tail):
    """x: (B, IN) f32 -> tanh(x @ W + b): (B, OUT) f32."""
    B = x.shape[0]
    k_p, out_dim = w_folded.shape
    # Single fused concat: append the constant [1, 0, ..., 0] tail so the
    # bias row of w_folded is picked up by the matmul.
    x_aug = jnp.concatenate(
        [x, jnp.broadcast_to(x_tail, (B, x_tail.shape[1]))], axis=1
    )

    itemsize = 4  # f32
    cost = pl.CostEstimate(
        flops=2 * B * k_p * out_dim,
        transcendentals=B * out_dim,
        bytes_accessed=(B * k_p + k_p * out_dim + B * out_dim) * itemsize,
    )

    # Single invocation, no grid: total footprint (~10 KB) is far below VMEM
    # on every TPU generation, so grid scaffolding would be pure overhead.
    return pl.pallas_call(
        linear_tanh_kernel,
        out_shape=jax.ShapeDtypeStruct((B, out_dim), jnp.float32),
        in_specs=[
            pl.BlockSpec(memory_space=pltpu.MemorySpace.VMEM),
            pl.BlockSpec(memory_space=pltpu.MemorySpace.VMEM),
        ],
        out_specs=pl.BlockSpec(memory_space=pltpu.MemorySpace.VMEM),
        cost_estimate=cost,
    )(x_aug, w_folded)


if __name__ == "__main__":
    key = jax.random.PRNGKey(0)
    k_x, k_w, k_b = jax.random.split(key, 3)

    # Input matching the module: x1 = torch.randn(1, 64)
    x = jax.random.normal(k_x, (1, IN), dtype=jnp.float32)

    # Deterministic parameter init (PyTorch nn.Linear-like uniform scale).
    bound = 1.0 / float(jnp.sqrt(IN))
    w = jax.random.uniform(
        k_w, (IN, OUT), minval=-bound, maxval=bound, dtype=jnp.float32
    )
    b = jax.random.uniform(
        k_b, (OUT,), minval=-bound, maxval=bound, dtype=jnp.float32
    )

    # One-time param prep (bias fold + sublane pad) -- off the hot path.
    w_folded, x_tail = prepare_params(w, b)

    out = linear_tanh(x, w_folded, x_tail)
    jax.block_until_ready(out)

    # Reference check in plain JAX.
    ref = jnp.tanh(x @ w + b[None, :])
    assert out.shape == (1, OUT)
    assert jnp.allclose(out, ref, atol=1e-5, rtol=1e-5)

    print("KERNEL_OK")
</pallas_src>

<mosaic_0001>
module attributes {stable_mosaic.version = 11 : i64} {
  func.func @linear_tanh_kernel(%arg0: memref<1x72xf32, #tpu.memory_space<vmem>>, %arg1: memref<72x32xf32, #tpu.memory_space<vmem>>, %arg2: memref<1x32xf32, #tpu.memory_space<vmem>>) attributes {dimension_semantics = [], scalar_prefetch = 0 : i64, scratch_operands = 0 : i64, tpu.core_type = #tpu.core_type<tc>} {
    %c0 = arith.constant 0 : index
    %c0_0 = arith.constant 0 : index
    %0 = vector.load %arg0[%c0, %c0_0] : memref<1x72xf32, #tpu.memory_space<vmem>>, vector<1x72xf32>
    %c0_1 = arith.constant 0 : index
    %c0_2 = arith.constant 0 : index
    %1 = vector.load %arg1[%c0_1, %c0_2] : memref<72x32xf32, #tpu.memory_space<vmem>>, vector<72x32xf32>
    %cst = arith.constant dense<0.000000e+00> : vector<1x32xf32>
    %2 = tpu.matmul %0, %1, %cst {dimension_numbers = #tpu.dot_dimension_numbers<[1], [0], [0], [1], [0, 0, 1, 1], [], []>, precision = #tpu.contract_precision<fp32>} : vector<1x72xf32>, vector<72x32xf32>, vector<1x32xf32> -> vector<1x32xf32>
    %3 = math.tanh %2 : vector<1x32xf32>
    %c0_3 = arith.constant 0 : index
    %c0_4 = arith.constant 0 : index
    %4 = vector.load %arg2[%c0_3, %c0_4] : memref<1x32xf32, #tpu.memory_space<vmem>>, vector<1x32xf32>
    tpu.vector_store %arg2[%c0_3, %c0_4], %3 {strides = array<i32>} : memref<1x32xf32, #tpu.memory_space<vmem>>, vector<1x32xf32>,
    return
  }
}

</mosaic_0001>

<llo_original>
// kernel: linear_tanh.1
$region0: #{linear_tanh.1}
  #allocation0 [shape = 'u32[]', space=smem, size = 0x4, offset = 0x4, fixed_abs, tag = 'smem constant byte address 0x4 - core index']
  #allocation1 [shape = 'u32[144,128]{1,0:T(1,128)}', space=vmem, size = 0x12000, scoped, tag = 'internal scratch']
  %s0 = inlined_call_operand.vmem [shape: f32[1,72], index: 0, kind: input, shape index: {}]
  %s1 = inlined_call_operand.vmem [shape: f32[72,32], index: 1, kind: input, shape index: {}]
  %s2 = inlined_call_operand.hbm [shape: f32[1,32], index: 2, kind: output, shape index: {}]
  %s3 = sld [smem:[#allocation0]]
  $region18: #{linear_tanh.1} parent=0
    _
  %s5 = ssub.s32 1, %s3
  %s6 = scalar_select 0, %s5, %s3
  $region1: #{linear_tanh.1} parent=0
    #allocation2 [shape = 'u8[512]{0}', space=vmem, size = 0x400, scoped, tag = 'output window, operand 0, single buffered']
    #allocation3 [shape = 's32[1]{0}', space=sflag, size = 0x4, scoped, tag = 'scoped memory for linear_tanh.1']
    %7 = vsyncpa [#allocation3], 0
    // Predicated region
    $region2: #{linear_tanh.1} parent=1 // pred_check
      _
    $region3: #{linear_tanh.1} parent=1 // pred_check_branch
      %9 = sbr.rel (0) target = $region5
    $region4: #{linear_tanh.1} parent=1 // pred_region
      _
    $region5: #{linear_tanh.1} parent=1 // pred_fallthru
      _
    // Predicated region
    $region6: #{linear_tanh.1} parent=1 // pred_check
      _
    $region7: #{linear_tanh.1} parent=1 // pred_check_branch
      %11 = sbr.rel (0) target = $region9
    $region8: #{linear_tanh.1} parent=1 // pred_region
      _
    $region9: #{linear_tanh.1} parent=1 // pred_fallthru
      _
    %v12 = vld [vmem:[%s0] sm:$0x1]
    %v13 = vld [vmem:[%s1] sm:$0xff]
    %v14 = vld [vmem:[%s1 + $0x8] sm:$0xff]
    %v15 = vld [vmem:[%s1 + $0x10] sm:$0xff]
    %v16 = vld [vmem:[%s1 + $0x18] sm:$0xff]
    %v17 = vld [vmem:[%s1 + $0x20] sm:$0xff]
    %v18 = vld [vmem:[%s1 + $0x28] sm:$0xff]
    %v19 = vld [vmem:[%s1 + $0x30] sm:$0xff]
    %v20 = vld [vmem:[%s1 + $0x38] sm:$0xff]
    %v21 = vld [vmem:[%s1 + $0x40] sm:$0xff]
    %vm22 = vcmask 588800
    %v24 = vsel %vm22, %v12, 0
    %26 = vmatprep.subr.mxu0 0.0
    %v27 = vand.u32 %v13, 4294901760
    %28 = vmatpush1.msra.mxu0 %v27
    %29 = vmatprep.subr.mxu0 0.0
    %v30 = vand.u32 %v14, 4294901760
    %31 = vmatpush1.msra.mxu0 %v30
    %32 = vmatprep.subr.mxu0 0.0
    %v33 = vand.u32 %v15, 4294901760
    %34 = vmatpush1.msra.mxu0 %v33
    %35 = vmatprep.subr.mxu0 0.0
    %v36 = vand.u32 %v16, 4294901760
    %37 = vmatpush1.msra.mxu0 %v36
    %38 = vmatprep.subr.mxu0 0.0
    %v39 = vand.u32 %v17, 4294901760
    %40 = vmatpush1.msra.mxu0 %v39
    %41 = vmatprep.subr.mxu0 0.0
    %v42 = vand.u32 %v18, 4294901760
    %43 = vmatpush1.msra.mxu0 %v42
    %44 = vmatprep.subr.mxu0 0.0
    %v45 = vand.u32 %v19, 4294901760
    %46 = vmatpush1.msra.mxu0 %v45
    %47 = vmatprep.subr.mxu0 0.0
    %v48 = vand.u32 %v20, 4294901760
    %49 = vmatpush1.msra.mxu0 %v48
    %50 = vmatprep.subr.mxu0 0.0
    %v51 = vand.u32 %v21, 4294901760
    %52 = vmatpush1.msra.mxu0 %v51
    %53 = vmatprep.subr.mxu0 0.0
    %54 = vmatpush1.msra.mxu0 0.0
    %55 = vmatprep.subr.mxu0 0.0
    %56 = vmatpush1.msra.mxu0 0.0
    %57 = vmatprep.subr.mxu0 0.0
    %58 = vmatpush1.msra.mxu0 0.0
    %59 = vmatprep.subr.mxu0 0.0
    %60 = vmatpush1.msra.mxu0 0.0
    %61 = vmatprep.subr.mxu0 0.0
    %62 = vmatpush1.msra.mxu0 0.0
    %63 = vmatprep.subr.mxu0 0.0
    %64 = vmatpush1.msra.mxu0 0.0
    %65 = vmatprep.subr.mxu0 0.0
    %66 = vmatpush1.msra.mxu0 0.0
    %67 = vmatprep.subr.mxu0 0.0
    %68 = vmatpush1.msra.mxu0 0.0
    %69 = vmatprep.subr.mxu0 0.0
    %70 = vmatpush1.msra.mxu0 0.0
    %71 = vmatprep.subr.mxu0 0.0
    %72 = vmatpush1.msra.mxu0 0.0
    %73 = vmatprep.subr.mxu0 0.0
    %74 = vmatpush1.msra.mxu0 0.0
    %75 = vmatprep.subr.mxu0 0.0
    %76 = vmatpush1.msra.mxu0 0.0
    %77 = vmatprep.subr.mxu0 0.0
    %78 = vmatpush1.msra.mxu0 0.0
    %79 = vmatprep.subr.mxu0 0.0
    %80 = vmatpush1.msra.mxu0 0.0
    %81 = vmatprep.subr.mxu0 0.0
    %82 = vmatpush1.msra.mxu0 0.0
    %83 = vmatprep.subr.mxu0 0.0
    %84 = vmatpush1.msra.mxu0 0.0
    %85 = vmatprep.subr.mxu0 0.0
    %86 = vmatpush1.msra.mxu0 0.0
    %87 = vmatprep.subr.mxu0 0.0
    %88 = vmatpush1.msra.mxu0 0.0
    %89 = vmatprep.subr.mxu0 0.0
    %90 = vmatpush1.msra.mxu0 0.0
    %91 = vmatprep.subr.mxu0 0.0
    %92 = vmatpush1.msra.mxu0 0.0
    %93 = vmatprep.subr.mxu0 0.0
    %94 = vmatpush1.msra.mxu0 0.0
    %95 = vmatprep.subr.mxu0 0.0
    %96 = vmatpush1.msra.mxu0 0.0
    %97 = vmatprep.subr.mxu0 0.0
    %98 = vmatpush1.msra.mxu0 0.0
    %99 = vmatprep.mubr.f32.mxu0 0.0
    %v100 = vand.u32 %v24, 4294901760
    %v101 = vsub.f32 %v24, %v100
    %v102 = vand.u32 %v101, 4294901760
    %v103 = vsub.f32 %v101, %v102
    %v104 = vand.u32 %v103, 4294901760
    %105 = vmatmul.mubr.f32.gmra.mrb[0].mxu0 %v104
    %v106 = vpop.f32.mrb[0].mxu0
    %v107 = vadd.f32 0.0, %v106
    %v108 = vpop.f32.mrb[0].mxu0
    %109 = vdwg.mxu0
    %110 = vmatprep.subr.mxu0 0.0
    %v111 = vand.u32 %v13, 4294901760
    %v112 = vsub.f32 %v13, %v111
    %v113 = vand.u32 %v112, 4294901760
    %v114 = vsub.f32 %v112, %v113
    %v115 = vand.u32 %v114, 4294901760
    %116 = vmatpush1.msra.mxu0 %v115
    %117 = vmatprep.subr.mxu0 0.0
    %v118 = vand.u32 %v14, 4294901760
    %v119 = vsub.f32 %v14, %v118
    %v120 = vand.u32 %v119, 4294901760
    %v121 = vsub.f32 %v119, %v120
    %v122 = vand.u32 %v121, 4294901760
    %123 = vmatpush1.msra.mxu0 %v122
    %124 = vmatprep.subr.mxu0 0.0
    %v125 = vand.u32 %v15, 4294901760
    %v126 = vsub.f32 %v15, %v125
    %v127 = vand.u32 %v126, 4294901760
    %v128 = vsub.f32 %v126, %v127
    %v129 = vand.u32 %v128, 4294901760
    %130 = vmatpush1.msra.mxu0 %v129
    %131 = vmatprep.subr.mxu0 0.0
    %v132 = vand.u32 %v16, 4294901760
    %v133 = vsub.f32 %v16, %v132
    %v134 = vand.u32 %v133, 4294901760
    %v135 = vsub.f32 %v133, %v134
    %v136 = vand.u32 %v135, 4294901760
    %137 = vmatpush1.msra.mxu0 %v136
    %138 = vmatprep.subr.mxu0 0.0
    %v139 = vand.u32 %v17, 4294901760
    %v140 = vsub.f32 %v17, %v139
    %v141 = vand.u32 %v140, 4294901760
    %v142 = vsub.f32 %v140, %v141
    %v143 = vand.u32 %v142, 4294901760
    %144 = vmatpush1.msra.mxu0 %v143
    %145 = vmatprep.subr.mxu0 0.0
    %v146 = vand.u32 %v18, 4294901760
    %v147 = vsub.f32 %v18, %v146
    %v148 = vand.u32 %v147, 4294901760
    %v149 = vsub.f32 %v147, %v148
    %v150 = vand.u32 %v149, 4294901760
    %151 = vmatpush1.msra.mxu0 %v150
    %152 = vmatprep.subr.mxu0 0.0
    %v153 = vand.u32 %v19, 4294901760
    %v154 = vsub.f32 %v19, %v153
    %v155 = vand.u32 %v154, 4294901760
    %v156 = vsub.f32 %v154, %v155
    %v157 = vand.u32 %v156, 4294901760
    %158 = vmatpush1.msra.mxu0 %v157
    %159 = vmatprep.subr.mxu0 0.0
    %v160 = vand.u32 %v20, 4294901760
    %v161 = vsub.f32 %v20, %v160
    %v162 = vand.u32 %v161, 4294901760
    %v163 = vsub.f32 %v161, %v162
    %v164 = vand.u32 %v163, 4294901760
    %165 = vmatpush1.msra.mxu0 %v164
    %166 = vmatprep.subr.mxu0 0.0
    %v167 = vand.u32 %v21, 4294901760
    %v168 = vsub.f32 %v21, %v167
    %v169 = vand.u32 %v168, 4294901760
    %v170 = vsub.f32 %v168, %v169
    %v171 = vand.u32 %v170, 4294901760
    %172 = vmatpush1.msra.mxu0 %v171
    %173 = vmatprep.subr.mxu0 0.0
    %174 = vmatpush1.msra.mxu0 0.0
    %175 = vmatprep.subr.mxu0 0.0
    %176 = vmatpush1.msra.mxu0 0.0
    %177 = vmatprep.subr.mxu0 0.0
    %178 = vmatpush1.msra.mxu0 0.0
    %179 = vmatprep.subr.mxu0 0.0
    %180 = vmatpush1.msra.mxu0 0.0
    %181 = vmatprep.subr.mxu0 0.0
    %182 = vmatpush1.msra.mxu0 0.0
    %183 = vmatprep.subr.mxu0 0.0
    %184 = vmatpush1.msra.mxu0 0.0
    %185 = vmatprep.subr.mxu0 0.0
    %186 = vmatpush1.msra.mxu0 0.0
    %187 = vmatprep.subr.mxu0 0.0
    %188 = vmatpush1.msra.mxu0 0.0
    %189 = vmatprep.subr.mxu0 0.0
    %190 = vmatpush1.msra.mxu0 0.0
    %191 = vmatprep.subr.mxu0 0.0
    %192 = vmatpush1.msra.mxu0 0.0
    %193 = vmatprep.subr.mxu0 0.0
    %194 = vmatpush1.msra.mxu0 0.0
    %195 = vmatprep.subr.mxu0 0.0
    %196 = vmatpush1.msra.mxu0 0.0
    %197 = vmatprep.subr.mxu0 0.0
    %198 = vmatpush1.msra.mxu0 0.0
    %199 = vmatprep.subr.mxu0 0.0
    %200 = vmatpush1.msra.mxu0 0.0
    %201 = vmatprep.subr.mxu0 0.0
    %202 = vmatpush1.msra.mxu0 0.0
    %203 = vmatprep.subr.mxu0 0.0
    %204 = vmatpush1.msra.mxu0 0.0
    %205 = vmatprep.subr.mxu0 0.0
    %206 = vmatpush1.msra.mxu0 0.0
    %207 = vmatprep.subr.mxu0 0.0
    %208 = vmatpush1.msra.mxu0 0.0
    %209 = vmatprep.subr.mxu0 0.0
    %210 = vmatpush1.msra.mxu0 0.0
    %211 = vmatprep.subr.mxu0 0.0
    %212 = vmatpush1.msra.mxu0 0.0
    %213 = vmatprep.subr.mxu0 0.0
    %214 = vmatpush1.msra.mxu0 0.0
    %215 = vmatprep.subr.mxu0 0.0
    %216 = vmatpush1.msra.mxu0 0.0
    %217 = vmatprep.subr.mxu0 0.0
    %218 = vmatpush1.msra.mxu0 0.0
    %219 = vmatprep.mubr.f32.mxu0 0.0
    %v220 = vand.u32 %v24, 4294901760
    %221 = vmatmul.mubr.f32.gmra.mrb[0].mxu0 %v220
    %v222 = vpop.f32.mrb[0].mxu0
    %v223 = vadd.f32 %v107, %v222
    %v224 = vpop.f32.mrb[0].mxu0
    %225 = vdwg.mxu0
    %226 = vmatprep.subr.mxu0 0.0
    %v227 = vand.u32 %v13, 4294901760
    %v228 = vsub.f32 %v13, %v227
    %229 = vmatpush1.msra.mxu0 %v228
    %230 = vmatprep.subr.mxu0 0.0
    %v231 = vand.u32 %v14, 4294901760
    %v232 = vsub.f32 %v14, %v231
    %233 = vmatpush1.msra.mxu0 %v232
    %234 = vmatprep.subr.mxu0 0.0
    %v235 = vand.u32 %v15, 4294901760
    %v236 = vsub.f32 %v15, %v235
    %237 = vmatpush1.msra.mxu0 %v236
    %238 = vmatprep.subr.mxu0 0.0
    %v239 = vand.u32 %v16, 4294901760
    %v240 = vsub.f32 %v16, %v239
    %241 = vmatpush1.msra.mxu0 %v240
    %242 = vmatprep.subr.mxu0 0.0
    %v243 = vand.u32 %v17, 4294901760
    %v244 = vsub.f32 %v17, %v243
    %245 = vmatpush1.msra.mxu0 %v244
    %246 = vmatprep.subr.mxu0 0.0
    %v247 = vand.u32 %v18, 4294901760
    %v248 = vsub.f32 %v18, %v247
    %249 = vmatpush1.msra.mxu0 %v248
    %250 = vmatprep.subr.mxu0 0.0
    %v251 = vand.u32 %v19, 4294901760
    %v252 = vsub.f32 %v19, %v251
    %253 = vmatpush1.msra.mxu0 %v252
    %254 = vmatprep.subr.mxu0 0.0
    %v255 = vand.u32 %v20, 4294901760
    %v256 = vsub.f32 %v20, %v255
    %257 = vmatpush1.msra.mxu0 %v256
    %258 = vmatprep.subr.mxu0 0.0
    %v259 = vand.u32 %v21, 4294901760
    %v260 = vsub.f32 %v21, %v259
    %261 = vmatpush1.msra.mxu0 %v260
    %262 = vmatprep.subr.mxu0 0.0
    %263 = vmatpush1.msra.mxu0 0.0
    %264 = vmatprep.subr.mxu0 0.0
    %265 = vmatpush1.msra.mxu0 0.0
    %266 = vmatprep.subr.mxu0 0.0
    %267 = vmatpush1.msra.mxu0 0.0
    %268 = vmatprep.subr.mxu0 0.0
    %269 = vmatpush1.msra.mxu0 0.0
    %270 = vmatprep.subr.mxu0 0.0
    %271 = vmatpush1.msra.mxu0 0.0
    %272 = vmatprep.subr.mxu0 0.0
    %273 = vmatpush1.msra.mxu0 0.0
    %274 = vmatprep.subr.mxu0 0.0
    %275 = vmatpush1.msra.mxu0 0.0
    %276 = vmatprep.subr.mxu0 0.0
    %277 = vmatpush1.msra.mxu0 0.0
    %278 = vmatprep.subr.mxu0 0.0
    %279 = vmatpush1.msra.mxu0 0.0
    %280 = vmatprep.subr.mxu0 0.0
    %281 = vmatpush1.msra.mxu0 0.0
    %282 = vmatprep.subr.mxu0 0.0
    %283 = vmatpush1.msra.mxu0 0.0
    %284 = vmatprep.subr.mxu0 0.0
    %285 = vmatpush1.msra.mxu0 0.0
    %286 = vmatprep.subr.mxu0 0.0
    %287 = vmatpush1.msra.mxu0 0.0
    %288 = vmatprep.subr.mxu0 0.0
    %289 = vmatpush1.msra.mxu0 0.0
    %290 = vmatprep.subr.mxu0 0.0
    %291 = vmatpush1.msra.mxu0 0.0
    %292 = vmatprep.subr.mxu0 0.0
    %293 = vmatpush1.msra.mxu0 0.0
    %294 = vmatprep.subr.mxu0 0.0
    %295 = vmatpush1.msra.mxu0 0.0
    %296 = vmatprep.subr.mxu0 0.0
    %297 = vmatpush1.msra.mxu0 0.0
    %298 = vmatprep.subr.mxu0 0.0
    %299 = vmatpush1.msra.mxu0 0.0
    %300 = vmatprep.subr.mxu0 0.0
    %301 = vmatpush1.msra.mxu0 0.0
    %302 = vmatprep.subr.mxu0 0.0
    %303 = vmatpush1.msra.mxu0 0.0
    %304 = vmatprep.subr.mxu0 0.0
    %305 = vmatpush1.msra.mxu0 0.0
    %306 = vmatprep.subr.mxu0 0.0
    %307 = vmatpush1.msra.mxu0 0.0
    %308 = vmatprep.mubr.f32.mxu0 0.0
    %v309 = vand.u32 %v24, 4294901760
    %v310 = vsub.f32 %v24, %v309
    %311 = vmatmul.mubr.f32.gmra.mrb[0].mxu0 %v310
    %v312 = vpop.f32.mrb[0].mxu0
    %v313 = vadd.f32 %v223, %v312
    %v314 = vpop.f32.mrb[0].mxu0
    %315 = vdwg.mxu0
    %316 = vmatprep.subr.mxu0 0.0
    %v317 = vand.u32 %v13, 4294901760
    %318 = vmatpush1.msra.mxu0 %v317
    %319 = vmatprep.subr.mxu0 0.0
    %v320 = vand.u32 %v14, 4294901760
    %321 = vmatpush1.msra.mxu0 %v320
    %322 = vmatprep.subr.mxu0 0.0
    %v323 = vand.u32 %v15, 4294901760
    %324 = vmatpush1.msra.mxu0 %v323
    %325 = vmatprep.subr.mxu0 0.0
    %v326 = vand.u32 %v16, 4294901760
    %327 = vmatpush1.msra.mxu0 %v326
    %328 = vmatprep.subr.mxu0 0.0
    %v329 = vand.u32 %v17, 4294901760
    %330 = vmatpush1.msra.mxu0 %v329
    %331 = vmatprep.subr.mxu0 0.0
    %v332 = vand.u32 %v18, 4294901760
    %333 = vmatpush1.msra.mxu0 %v332
    %334 = vmatprep.subr.mxu0 0.0
    %v335 = vand.u32 %v19, 4294901760
    %336 = vmatpush1.msra.mxu0 %v335
    %337 = vmatprep.subr.mxu0 0.0
    %v338 = vand.u32 %v20, 4294901760
    %339 = vmatpush1.msra.mxu0 %v338
    %340 = vmatprep.subr.mxu0 0.0
    %v341 = vand.u32 %v21, 4294901760
    %342 = vmatpush1.msra.mxu0 %v341
    %343 = vmatprep.subr.mxu0 0.0
    %344 = vmatpush1.msra.mxu0 0.0
    %345 = vmatprep.subr.mxu0 0.0
    %346 = vmatpush1.msra.mxu0 0.0
    %347 = vmatprep.subr.mxu0 0.0
    %348 = vmatpush1.msra.mxu0 0.0
    %349 = vmatprep.subr.mxu0 0.0
    %350 = vmatpush1.msra.mxu0 0.0
    %351 = vmatprep.subr.mxu0 0.0
    %352 = vmatpush1.msra.mxu0 0.0
    %353 = vmatprep.subr.mxu0 0.0
    %354 = vmatpush1.msra.mxu0 0.0
    %355 = vmatprep.subr.mxu0 0.0
    %356 = vmatpush1.msra.mxu0 0.0
    %357 = vmatprep.subr.mxu0 0.0
    %358 = vmatpush1.msra.mxu0 0.0
    %359 = vmatprep.subr.mxu0 0.0
    %360 = vmatpush1.msra.mxu0 0.0
    %361 = vmatprep.subr.mxu0 0.0
    %362 = vmatpush1.msra.mxu0 0.0
    %363 = vmatprep.subr.mxu0 0.0
    %364 = vmatpush1.msra.mxu0 0.0
    %365 = vmatprep.subr.mxu0 0.0
    %366 = vmatpush1.msra.mxu0 0.0
    %367 = vmatprep.subr.mxu0 0.0
    %368 = vmatpush1.msra.mxu0 0.0
    %369 = vmatprep.subr.mxu0 0.0
    %370 = vmatpush1.msra.mxu0 0.0
    %371 = vmatprep.subr.mxu0 0.0
    %372 = vmatpush1.msra.mxu0 0.0
    %373 = vmatprep.subr.mxu0 0.0
    %374 = vmatpush1.msra.mxu0 0.0
    %375 = vmatprep.subr.mxu0 0.0
    %376 = vmatpush1.msra.mxu0 0.0
    %377 = vmatprep.subr.mxu0 0.0
    %378 = vmatpush1.msra.mxu0 0.0
    %379 = vmatprep.subr.mxu0 0.0
    %380 = vmatpush1.msra.mxu0 0.0
    %381 = vmatprep.subr.mxu0 0.0
    %382 = vmatpush1.msra.mxu0 0.0
    %383 = vmatprep.subr.mxu0 0.0
    %384 = vmatpush1.msra.mxu0 0.0
    %385 = vmatprep.subr.mxu0 0.0
    %386 = vmatpush1.msra.mxu0 0.0
    %387 = vmatprep.subr.mxu0 0.0
    %388 = vmatpush1.msra.mxu0 0.0
    %389 = vmatprep.mubr.f32.mxu0 0.0
    %v390 = vand.u32 %v24, 4294901760
    %v391 = vsub.f32 %v24, %v390
    %v392 = vand.u32 %v391, 4294901760
    %393 = vmatmul.mubr.f32.gmra.mrb[0].mxu0 %v392
    %v394 = vpop.f32.mrb[0].mxu0
    %v395 = vadd.f32 %v313, %v394
    %v396 = vpop.f32.mrb[0].mxu0
    %397 = vdwg.mxu0
    %398 = vmatprep.subr.mxu0 0.0
    %v399 = vand.u32 %v13, 4294901760
    %v400 = vsub.f32 %v13, %v399
    %v401 = vand.u32 %v400, 4294901760
    %402 = vmatpush1.msra.mxu0 %v401
    %403 = vmatprep.subr.mxu0 0.0
    %v404 = vand.u32 %v14, 4294901760
    %v405 = vsub.f32 %v14, %v404
    %v406 = vand.u32 %v405, 4294901760
    %407 = vmatpush1.msra.mxu0 %v406
    %408 = vmatprep.subr.mxu0 0.0
    %v409 = vand.u32 %v15, 4294901760
    %v410 = vsub.f32 %v15, %v409
    %v411 = vand.u32 %v410, 4294901760
    %412 = vmatpush1.msra.mxu0 %v411
    %413 = vmatprep.subr.mxu0 0.0
    %v414 = vand.u32 %v16, 4294901760
    %v415 = vsub.f32 %v16, %v414
    %v416 = vand.u32 %v415, 4294901760
    %417 = vmatpush1.msra.mxu0 %v416
    %418 = vmatprep.subr.mxu0 0.0
    %v419 = vand.u32 %v17, 4294901760
    %v420 = vsub.f32 %v17, %v419
    %v421 = vand.u32 %v420, 4294901760
    %422 = vmatpush1.msra.mxu0 %v421
    %423 = vmatprep.subr.mxu0 0.0
    %v424 = vand.u32 %v18, 4294901760
    %v425 = vsub.f32 %v18, %v424
    %v426 = vand.u32 %v425, 4294901760
    %427 = vmatpush1.msra.mxu0 %v426
    %428 = vmatprep.subr.mxu0 0.0
    %v429 = vand.u32 %v19, 4294901760
    %v430 = vsub.f32 %v19, %v429
    %v431 = vand.u32 %v430, 4294901760
    %432 = vmatpush1.msra.mxu0 %v431
    %433 = vmatprep.subr.mxu0 0.0
    %v434 = vand.u32 %v20, 4294901760
    %v435 = vsub.f32 %v20, %v434
    %v436 = vand.u32 %v435, 4294901760
    %437 = vmatpush1.msra.mxu0 %v436
    %438 = vmatprep.subr.mxu0 0.0
    %v439 = vand.u32 %v21, 4294901760
    %v440 = vsub.f32 %v21, %v439
    %v441 = vand.u32 %v440, 4294901760
    %442 = vmatpush1.msra.mxu0 %v441
    %443 = vmatprep.subr.mxu0 0.0
    %444 = vmatpush1.msra.mxu0 0.0
    %445 = vmatprep.subr.mxu0 0.0
    %446 = vmatpush1.msra.mxu0 0.0
    %447 = vmatprep.subr.mxu0 0.0
    %448 = vmatpush1.msra.mxu0 0.0
    %449 = vmatprep.subr.mxu0 0.0
    %450 = vmatpush1.msra.mxu0 0.0
    %451 = vmatprep.subr.mxu0 0.0
    %452 = vmatpush1.msra.mxu0 0.0
    %453 = vmatprep.subr.mxu0 0.0
    %454 = vmatpush1.msra.mxu0 0.0
    %455 = vmatprep.subr.mxu0 0.0
    %456 = vmatpush1.msra.mxu0 0.0
    %457 = vmatprep.subr.mxu0 0.0
    %458 = vmatpush1.msra.mxu0 0.0
    %459 = vmatprep.subr.mxu0 0.0
    %460 = vmatpush1.msra.mxu0 0.0
    %461 = vmatprep.subr.mxu0 0.0
    %462 = vmatpush1.msra.mxu0 0.0
    %463 = vmatprep.subr.mxu0 0.0
    %464 = vmatpush1.msra.mxu0 0.0
    %465 = vmatprep.subr.mxu0 0.0
    %466 = vmatpush1.msra.mxu0 0.0
    %467 = vmatprep.subr.mxu0 0.0
    %468 = vmatpush1.msra.mxu0 0.0
    %469 = vmatprep.subr.mxu0 0.0
    %470 = vmatpush1.msra.mxu0 0.0
    %471 = vmatprep.subr.mxu0 0.0
    %472 = vmatpush1.msra.mxu0 0.0
    %473 = vmatprep.subr.mxu0 0.0
    %474 = vmatpush1.msra.mxu0 0.0
    %475 = vmatprep.subr.mxu0 0.0
    %476 = vmatpush1.msra.mxu0 0.0
    %477 = vmatprep.subr.mxu0 0.0
    %478 = vmatpush1.msra.mxu0 0.0
    %479 = vmatprep.subr.mxu0 0.0
    %480 = vmatpush1.msra.mxu0 0.0
    %481 = vmatprep.subr.mxu0 0.0
    %482 = vmatpush1.msra.mxu0 0.0
    %483 = vmatprep.subr.mxu0 0.0
    %484 = vmatpush1.msra.mxu0 0.0
    %485 = vmatprep.subr.mxu0 0.0
    %486 = vmatpush1.msra.mxu0 0.0
    %487 = vmatprep.subr.mxu0 0.0
    %488 = vmatpush1.msra.mxu0 0.0
    %489 = vmatprep.mubr.f32.mxu0 0.0
    %v490 = vand.u32 %v24, 4294901760
    %491 = vmatmul.mubr.f32.gmra.mrb[0].mxu0 %v490
    %v492 = vpop.f32.mrb[0].mxu0
    %v493 = vadd.f32 %v395, %v492
    %v494 = vpop.f32.mrb[0].mxu0
    %495 = vdwg.mxu0
    %496 = vmatprep.subr.mxu0 0.0
    %v497 = vand.u32 %v13, 4294901760
    %498 = vmatpush1.msra.mxu0 %v497
    %499 = vmatprep.subr.mxu0 0.0
    %v500 = vand.u32 %v14, 4294901760
    %501 = vmatpush1.msra.mxu0 %v500
    %502 = vmatprep.subr.mxu0 0.0
    %v503 = vand.u32 %v15, 4294901760
    %504 = vmatpush1.msra.mxu0 %v503
    %505 = vmatprep.subr.mxu0 0.0
    %v506 = vand.u32 %v16, 4294901760
    %507 = vmatpush1.msra.mxu0 %v506
    %508 = vmatprep.subr.mxu0 0.0
    %v509 = vand.u32 %v17, 4294901760
    %510 = vmatpush1.msra.mxu0 %v509
    %511 = vmatprep.subr.mxu0 0.0
    %v512 = vand.u32 %v18, 4294901760
    %513 = vmatpush1.msra.mxu0 %v512
    %514 = vmatprep.subr.mxu0 0.0
    %v515 = vand.u32 %v19, 4294901760
    %516 = vmatpush1.msra.mxu0 %v515
    %517 = vmatprep.subr.mxu0 0.0
    %v518 = vand.u32 %v20, 4294901760
    %519 = vmatpush1.msra.mxu0 %v518
    %520 = vmatprep.subr.mxu0 0.0
    %v521 = vand.u32 %v21, 4294901760
    %522 = vmatpush1.msra.mxu0 %v521
    %523 = vmatprep.subr.mxu0 0.0
    %524 = vmatpush1.msra.mxu0 0.0
    %525 = vmatprep.subr.mxu0 0.0
    %526 = vmatpush1.msra.mxu0 0.0
    %527 = vmatprep.subr.mxu0 0.0
    %528 = vmatpush1.msra.mxu0 0.0
    %529 = vmatprep.subr.mxu0 0.0
    %530 = vmatpush1.msra.mxu0 0.0
    %531 = vmatprep.subr.mxu0 0.0
    %532 = vmatpush1.msra.mxu0 0.0
    %533 = vmatprep.subr.mxu0 0.0
    %534 = vmatpush1.msra.mxu0 0.0
    %535 = vmatprep.subr.mxu0 0.0
    %536 = vmatpush1.msra.mxu0 0.0
    %537 = vmatprep.subr.mxu0 0.0
    %538 = vmatpush1.msra.mxu0 0.0
    %539 = vmatprep.subr.mxu0 0.0
    %540 = vmatpush1.msra.mxu0 0.0
    %541 = vmatprep.subr.mxu0 0.0
    %542 = vmatpush1.msra.mxu0 0.0
    %543 = vmatprep.subr.mxu0 0.0
    %544 = vmatpush1.msra.mxu0 0.0
    %545 = vmatprep.subr.mxu0 0.0
    %546 = vmatpush1.msra.mxu0 0.0
    %547 = vmatprep.subr.mxu0 0.0
    %548 = vmatpush1.msra.mxu0 0.0
    %549 = vmatprep.subr.mxu0 0.0
    %550 = vmatpush1.msra.mxu0 0.0
    %551 = vmatprep.subr.mxu0 0.0
    %552 = vmatpush1.msra.mxu0 0.0
    %553 = vmatprep.subr.mxu0 0.0
    %554 = vmatpush1.msra.mxu0 0.0
    %555 = vmatprep.subr.mxu0 0.0
    %556 = vmatpush1.msra.mxu0 0.0
    %557 = vmatprep.subr.mxu0 0.0
    %558 = vmatpush1.msra.mxu0 0.0
    %559 = vmatprep.subr.mxu0 0.0
    %560 = vmatpush1.msra.mxu0 0.0
    %561 = vmatprep.subr.mxu0 0.0
    %562 = vmatpush1.msra.mxu0 0.0
    %563 = vmatprep.subr.mxu0 0.0
    %564 = vmatpush1.msra.mxu0 0.0
    %565 = vmatprep.subr.mxu0 0.0
    %566 = vmatpush1.msra.mxu0 0.0
    %567 = vmatprep.subr.mxu0 0.0
    %568 = vmatpush1.msra.mxu0 0.0
    %569 = vmatprep.mubr.f32.mxu0 0.0
    %v570 = vand.u32 %v24, 4294901760
    %571 = vmatmul.mubr.f32.gmra.mrb[0].mxu0 %v570
    %v572 = vpop.f32.mrb[0].mxu0
    %v573 = vadd.f32 %v493, %v572
    %v574 = vpop.f32.mrb[0].mxu0
    %575 = vdwg.mxu0
    %v576 = vtanh.pop %v573
    %vm577 = vcmask 253952
    %578 = vst.msk [vmem:[#allocation2] sm:$0x1] %vm577, %v576
    // Predicated region
    $region10: #{linear_tanh.1} parent=1 // pred_check
      _
    $region11: #{linear_tanh.1} parent=1 // pred_check_branch
      %580 = sbr.rel (0) target = $region13
    $region12: #{linear_tanh.1} parent=1 // pred_region
      %s582 = ssub.s32 16, 16
      %583 = vsyncadd [#allocation3], %s582
      %s585 = sshll.u32 [#allocation2], 4
      %s586 = int_to_ptr.vmem [resolvable:$true] %s585
      %588 = dma.vmem_to_hbm [thread:$0]  %s586, 16, %s2, [#allocation3]
    $region13: #{linear_tanh.1} parent=1 // pred_fallthru
      _
    // Predicated region
    $region14: #{linear_tanh.1} parent=1 // pred_check
      _
    $region15: #{linear_tanh.1} parent=1 // pred_check_branch
      %590 = sbr.rel (0) target = $region17
    $region16: #{linear_tanh.1} parent=1 // pred_region
      %591 = dma.done [#allocation3], 16
    $region17: #{linear_tanh.1} parent=1 // pred_fallthru
      _
    %592 = vsyncpa [#allocation3], 1

</llo_original>
